<compile_context>
chip_gen: v7x
topology: tpu7x:2x2x1
jax: 0.10.0
libtpu: 0.0.40
codegen_flags: <defaults>
</compile_context>

<pallas_src>
import functools

import jax
import jax.numpy as jnp
from jax.experimental import pallas as pl
from jax.experimental.pallas import tpu as pltpu


# ---------------------------------------------------------------------------
# Helpers
# ---------------------------------------------------------------------------
def _vmem_limit_bytes():
    """Per-call scoped-VMEM budget derived from the chip's physical capacity."""
    cap = 128 * 1024 * 1024
    try:
        cap = int(getattr(pltpu.get_tpu_info(), "vmem_capacity_bytes", cap))
    except Exception:
        pass
    # Leave headroom for compiler scratch: v7x (64 MiB) -> 48 MiB,
    # v5e/v6e (128 MiB) -> 96 MiB (capped at 100 MiB).
    return int(min(100 * 1024 * 1024, (cap * 3) // 4))


def _pick_tile(total, preferred):
    """Largest divisor of `total` that is <= `preferred` and sublane-aligned."""
    if total <= preferred:
        return total
    for t in range(preferred, 0, -1):
        if total % t == 0 and t % 8 == 0:
            return t
    return total  # fall back to a full-extent block (always legal)


def _pick_batch_block(batch, tq):
    """Fold batch rows into each block when the q tile is short (small windows)."""
    if tq >= 128:
        return 1
    target = max(1, 256 // tq)
    for cand in range(min(batch, target), 0, -1):
        if batch % cand == 0:
            return cand
    return 1


# ---------------------------------------------------------------------------
# Stage 1: fused QKV projection  (B*N, C) @ (C, 3C) + b_qkv
# ---------------------------------------------------------------------------
def _qkv_proj_kernel(x_ref, w_ref, b_ref, o_ref):
    acc = jnp.dot(x_ref[...], w_ref[...], preferred_element_type=jnp.float32)
    o_ref[...] = (acc + b_ref[...].astype(jnp.float32)).astype(o_ref.dtype)


def _qkv_projection(x2d, w_qkv, b_qkv, *, row_block=256):
    M, C = x2d.shape
    three_c = w_qkv.shape[1]
    tm = _pick_tile(M, row_block)
    itemsize = jnp.dtype(x2d.dtype).itemsize
    cost = pl.CostEstimate(
        flops=int(2 * M * C * three_c),
        transcendentals=0,
        bytes_accessed=int((M * C + C * three_c + three_c + M * three_c) * itemsize),
    )
    return pl.pallas_call(
        _qkv_proj_kernel,
        out_shape=jax.ShapeDtypeStruct((M, three_c), x2d.dtype),
        grid_spec=pltpu.PrefetchScalarGridSpec(
            num_scalar_prefetch=0,
            grid=(M // tm,),
            in_specs=[
                pl.BlockSpec((tm, C), lambda i: (i, 0)),
                pl.BlockSpec((C, three_c), lambda i: (0, 0)),
                pl.BlockSpec((1, three_c), lambda i: (0, 0)),
            ],
            out_specs=pl.BlockSpec((tm, three_c), lambda i: (i, 0)),
        ),
        compiler_params=pltpu.CompilerParams(
            dimension_semantics=("parallel",),
            vmem_limit_bytes=_vmem_limit_bytes(),
        ),
        cost_estimate=cost,
    )(x2d, w_qkv, b_qkv)


# ---------------------------------------------------------------------------
# Stage 2: flash attention (online softmax over kv tiles) + output projection
# ---------------------------------------------------------------------------
def _flash_mhsa_kernel(q_ref, k_ref, v_ref, wproj_ref, bproj_ref, o_ref,
                       m_scr, l_scr, acc_scr, ctx_scr,
                       *, num_heads, head_dim, batch_block, q_tile):
    """One (batch-block, q-tile) resident output block; kv-tile reduction.

    q_ref:     (G, tq, D)  pre-projected, pre-scaled Q   (G = batch_block * H)
    k_ref:     (G, tk, D)
    v_ref:     (G, tk, D)
    wproj_ref: (C, C)
    bproj_ref: (1, C)
    o_ref:     (bb, tq, C)
    m/l_scr:   (G, tq, 1)  f32 running max / denom
    acc_scr:   (G, tq, D)  f32 running numerator
    ctx_scr:   (bb*tq, C)  f32 merged lane-dense attention context
    """
    ki = pl.program_id(2)
    nk = pl.num_programs(2)
    cdtype = q_ref.dtype

    @pl.when(ki == 0)
    def _init():
        m_scr[...] = jnp.full_like(m_scr, -jnp.inf)
        l_scr[...] = jnp.zeros_like(l_scr)
        acc_scr[...] = jnp.zeros_like(acc_scr)

    q = q_ref[...]                                   # (G, tq, D) native dtype
    k = k_ref[...]                                   # (G, tk, D)
    v = v_ref[...]                                   # (G, tk, D)

    # Scores: batched over G (batch x head) on the free axis, f32 accumulation.
    s = jnp.einsum("gqd,gkd->gqk", q, k,
                   preferred_element_type=jnp.float32)          # (G, tq, tk)

    m_prev = m_scr[...]
    m_new = jnp.maximum(m_prev, jnp.max(s, axis=-1, keepdims=True))
    alpha = jnp.exp(m_prev - m_new)                              # f32
    p = jnp.exp(s - m_new)                                       # (G, tq, tk) f32
    l_scr[...] = alpha * l_scr[...] + jnp.sum(p, axis=-1, keepdims=True)
    acc_scr[...] = alpha * acc_scr[...] + jnp.einsum(
        "gqk,gkd->gqd", p.astype(cdtype), v,
        preferred_element_type=jnp.float32)
    m_scr[...] = m_new

    @pl.when(ki == nk - 1)
    def _finalize():
        # Exact reciprocal: epilogue-only, so the extra cost is negligible and
        # it avoids the ~1e-3 error of the approximate EUP reciprocal.
        inv_l = pl.reciprocal(l_scr[...], approx=False)          # (G, tq, 1)
        ctx = acc_scr[...] * inv_l                               # (G, tq, D) f32
        # Merge heads into a lane-dense (bb*tq, C) slab with static slices.
        for b in range(batch_block):
            for h in range(num_heads):
                ctx_scr[b * q_tile:(b + 1) * q_tile,
                        h * head_dim:(h + 1) * head_dim] = ctx[b * num_heads + h]
        out = jnp.dot(ctx_scr[...].astype(cdtype), wproj_ref[...],
                      preferred_element_type=jnp.float32)        # (bb*tq, C)
        out = out + bproj_ref[...].astype(jnp.float32)
        # attn_drop / proj_drop / drop_path are identity (rates 0.0 / eval).
        o_ref[...] = out.reshape(batch_block, q_tile, -1).astype(o_ref.dtype)


# ---------------------------------------------------------------------------
# Wrapper: HierarchicalAttention.forward for (B, N, C) input
# ---------------------------------------------------------------------------
def hierarchical_attention(x, w_qkv, w_proj, b_proj, *, num_heads, b_qkv=None,
                           q_block=256, kv_block=256, proj_row_block=256,
                           compute_dtype=None):
    B, N, C = x.shape
    assert C % num_heads == 0, "dim must be divisible by num_heads"
    D = C // num_heads
    cdtype = jnp.dtype(compute_dtype) if compute_dtype is not None else x.dtype

    if b_qkv is None:
        b_qkv = jnp.zeros((1, 3 * C), dtype=x.dtype)     # qkv_bias=False default
    b_qkv = b_qkv.reshape(1, 3 * C)
    b_proj = b_proj.reshape(1, C)

    # Fold the 1/sqrt(D) softmax scale into the Q columns of the fused QKV
    # weight/bias on the host (free; removes the in-kernel scale multiply).
    scale = D ** -0.5
    w_qkv_s = w_qkv.at[:, :C].multiply(scale)
    b_qkv_s = b_qkv.at[:, :C].multiply(scale)

    # Stage 1: one lane-dense (B*N, C) x (C, 3C) projection (Pallas matmul).
    x2d = x.reshape(B * N, C).astype(cdtype)
    qkv = _qkv_projection(x2d, w_qkv_s.astype(cdtype), b_qkv_s.astype(cdtype),
                          row_block=proj_row_block)               # (B*N, 3C)

    # Re-layout to (B*H, N, D) so heads sit on the free batch axis of the
    # attention matmuls (cheap XLA transpose, O(B*N*C) bytes).
    qkv = qkv.reshape(B, N, 3, num_heads, D).transpose(2, 0, 3, 1, 4)
    q = qkv[0].reshape(B * num_heads, N, D)
    k = qkv[1].reshape(B * num_heads, N, D)
    v = qkv[2].reshape(B * num_heads, N, D)

    # Tile sizes.  For short windows, fold several batch rows per block.
    tq = _pick_tile(N, q_block)
    tk = _pick_tile(N, kv_block)
    nq, nk = N // tq, N // tk
    bb = _pick_batch_block(B, tq)
    G = bb * num_heads

    kernel = functools.partial(_flash_mhsa_kernel, num_heads=num_heads,
                               head_dim=D, batch_block=bb, q_tile=tq)

    itemsize = jnp.dtype(cdtype).itemsize
    flops = 4 * B * N * N * C + 2 * B * N * C * C          # attention + out-proj
    transcendentals = B * num_heads * N * N
    bytes_accessed = (B * N * C                              # Q (read once/q-tile)
                      + 2 * nq * B * N * C                   # K,V re-streamed per q tile
                      + C * C + C                            # out-proj weights
                      + B * N * C) * itemsize                # output write

    grid_spec = pltpu.PrefetchScalarGridSpec(
        num_scalar_prefetch=0,
        grid=(B // bb, nq, nk),
        in_specs=[
            pl.BlockSpec((G, tq, D), lambda b, qi, ki: (b, qi, 0)),   # Q
            pl.BlockSpec((G, tk, D), lambda b, qi, ki: (b, ki, 0)),   # K
            pl.BlockSpec((G, tk, D), lambda b, qi, ki: (b, ki, 0)),   # V
            # TODO(synk): grid-invariant weights still use the default double
            # buffer; pipeline_mode=pl.Buffered(1) would single-buffer them.
            pl.BlockSpec((C, C), lambda b, qi, ki: (0, 0)),           # w_proj
            pl.BlockSpec((1, C), lambda b, qi, ki: (0, 0)),           # b_proj
        ],
        out_specs=pl.BlockSpec((bb, tq, C), lambda b, qi, ki: (b, qi, 0)),
        scratch_shapes=[
            pltpu.VMEM((G, tq, 1), jnp.float32),      # running max  m
            pltpu.VMEM((G, tq, 1), jnp.float32),      # running denom l
            pltpu.VMEM((G, tq, D), jnp.float32),      # running numerator
            pltpu.VMEM((bb * tq, C), jnp.float32),    # merged lane-dense context
        ],
    )

    return pl.pallas_call(
        kernel,
        out_shape=jax.ShapeDtypeStruct((B, N, C), x.dtype),
        grid_spec=grid_spec,
        compiler_params=pltpu.CompilerParams(
            dimension_semantics=("parallel", "parallel", "arbitrary"),
            vmem_limit_bytes=_vmem_limit_bytes(),
        ),
        cost_estimate=pl.CostEstimate(
            flops=int(flops),
            transcendentals=int(transcendentals),
            bytes_accessed=int(bytes_accessed),
        ),
    )(q, k, v, w_proj.astype(cdtype), b_proj.astype(cdtype))


# ---------------------------------------------------------------------------
# Pure-JAX reference of the same forward pass
# ---------------------------------------------------------------------------
def _reference(x, w_qkv, b_qkv, w_proj, b_proj, num_heads):
    B, N, C = x.shape
    D = C // num_heads
    qkv = jnp.einsum("bnc,cd->bnd", x, w_qkv)
    if b_qkv is not None:
        qkv = qkv + b_qkv.reshape(1, 1, 3 * C)
    q, k, v = jnp.split(qkv, 3, axis=-1)

    def split_heads(t):
        return t.reshape(B, N, num_heads, D).transpose(0, 2, 1, 3)

    q, k, v = split_heads(q), split_heads(k), split_heads(v)
    s = jnp.einsum("bhqd,bhkd->bhqk", q * (D ** -0.5), k)
    p = jax.nn.softmax(s, axis=-1)
    o = jnp.einsum("bhqk,bhkd->bhqd", p, v)
    o = o.transpose(0, 2, 1, 3).reshape(B, N, C)
    return jnp.einsum("bnc,cd->bnd", o, w_proj) + b_proj.reshape(1, 1, C)


if __name__ == "__main__":
    # Small shapes consistent with the module's (B, N, C) token input.
    B, N, C = 2, 16, 64
    NUM_HEADS = 8            # module default
    # qkv_bias=False (module default); attn_drop/proj_drop/drop_path = 0.0.

    key = jax.random.PRNGKey(0)
    kx, kqkv, kproj, kb = jax.random.split(key, 4)

    x = jax.random.normal(kx, (B, N, C), dtype=jnp.float32)
    w_qkv = 0.05 * jax.random.normal(kqkv, (C, 3 * C), dtype=jnp.float32)
    w_proj = 0.05 * jax.random.normal(kproj, (C, C), dtype=jnp.float32)
    b_proj = 0.05 * jax.random.normal(kb, (1, C), dtype=jnp.float32)

    # fp32 here to keep the numerical check tight; production fp32 models should
    # pass compute_dtype=jnp.bfloat16 for full-rate MXU (f32 accumulation kept).
    out = hierarchical_attention(x, w_qkv, w_proj, b_proj, num_heads=NUM_HEADS)
    out = jax.block_until_ready(out)

    ref = _reference(x, w_qkv, None, w_proj, b_proj, NUM_HEADS)
    assert out.shape == (B, N, C)
    assert jnp.allclose(out, ref, atol=1e-3, rtol=1e-2), "mismatch vs reference"

    print("KERNEL_OK")
</pallas_src>

<mosaic_0001>
module attributes {stable_mosaic.version = 11 : i64} {
  func.func @_qkv_proj_kernel(%arg0: i32, %arg1: memref<32x64xf32, #tpu.memory_space<vmem>>, %arg2: memref<64x192xf32, #tpu.memory_space<vmem>>, %arg3: memref<1x192xf32, #tpu.memory_space<vmem>>, %arg4: memref<32x192xf32, #tpu.memory_space<vmem>>) attributes {dimension_semantics = [#tpu.dimension_semantics<parallel>], iteration_bounds = array<i64: 1>, scalar_prefetch = 0 : i64, scratch_operands = 0 : i64, tpu.core_type = #tpu.core_type<tc>, window_params = [{transform_indices = @transform_0, window_bounds = array<i64: 32, 64>}, {pipeline_mode = #tpu.pipeline_mode<synchronous>, transform_indices = @transform_1, window_bounds = array<i64: 64, 192>}, {pipeline_mode = #tpu.pipeline_mode<synchronous>, transform_indices = @transform_2, window_bounds = array<i64: 1, 192>}, {transform_indices = @transform_3, window_bounds = array<i64: 32, 192>}]} {
    %c0 = arith.constant 0 : index
    %c0_0 = arith.constant 0 : index
    %0 = vector.load %arg1[%c0, %c0_0] : memref<32x64xf32, #tpu.memory_space<vmem>>, vector<32x64xf32>
    %c0_1 = arith.constant 0 : index
    %c0_2 = arith.constant 0 : index
    %1 = vector.load %arg2[%c0_1, %c0_2] : memref<64x192xf32, #tpu.memory_space<vmem>>, vector<64x192xf32>
    %cst = arith.constant dense<0.000000e+00> : vector<32x192xf32>
    %2 = tpu.matmul %0, %1, %cst {dimension_numbers = #tpu.dot_dimension_numbers<[1], [0], [0], [1], [0, 0, 1, 1], [], []>} : vector<32x64xf32>, vector<64x192xf32>, vector<32x192xf32> -> vector<32x192xf32>
    %c0_3 = arith.constant 0 : index
    %c0_4 = arith.constant 0 : index
    %3 = vector.load %arg3[%c0_3, %c0_4] : memref<1x192xf32, #tpu.memory_space<vmem>>, vector<1x192xf32>
    %4 = vector.broadcast %3 : vector<1x192xf32> to vector<32x192xf32>
    %5 = arith.addf %2, %4 : vector<32x192xf32>
    %c0_5 = arith.constant 0 : index
    %c0_6 = arith.constant 0 : index
    %6 = vector.load %arg4[%c0_5, %c0_6] : memref<32x192xf32, #tpu.memory_space<vmem>>, vector<32x192xf32>
    tpu.vector_store %arg4[%c0_5, %c0_6], %5 {strides = array<i32>} : memref<32x192xf32, #tpu.memory_space<vmem>>, vector<32x192xf32>,
    return
  }
  func.func @transform_0(%arg0: i32) -> (i32, i32) {
    %c0_i32 = arith.constant 0 : i32
    %c0_i32_0 = arith.constant 0 : i32
    return %arg0, %c0_i32 : i32, i32
  }
  func.func @transform_1(%arg0: i32) -> (i32, i32) {
    %c0_i32 = arith.constant 0 : i32
    %c0_i32_0 = arith.constant 0 : i32
    %c0_i32_1 = arith.constant 0 : i32
    return %c0_i32, %c0_i32_0 : i32, i32
  }
  func.func @transform_2(%arg0: i32) -> (i32, i32) {
    %c0_i32 = arith.constant 0 : i32
    %c0_i32_0 = arith.constant 0 : i32
    %c0_i32_1 = arith.constant 0 : i32
    return %c0_i32, %c0_i32_0 : i32, i32
  }
  func.func @transform_3(%arg0: i32) -> (i32, i32) {
    %c0_i32 = arith.constant 0 : i32
    %c0_i32_0 = arith.constant 0 : i32
    return %arg0, %c0_i32 : i32, i32
  }
}

</mosaic_0001>

<llo_original>
// kernel: tpu_custom_call.1
$region0: #{tpu_custom_call.1}
  #allocation0 [shape = 'u32[]', space=smem, size = 0x4, offset = 0x4, fixed_abs, tag = 'smem constant byte address 0x4 - core index']
  #allocation1 [shape = 'u32[144,128]{1,0:T(1,128)}', space=vmem, size = 0x12000, scoped, tag = 'internal scratch']
  %s0 = inlined_call_operand.hbm [shape: f32[32,64], index: 0, kind: input, shape index: {}]
  %s1 = inlined_call_operand.hbm [shape: f32[64,192], index: 1, kind: input, shape index: {}]
  %s2 = inlined_call_operand.hbm [shape: f32[1,192], index: 2, kind: input, shape index: {}]
  %s3 = inlined_call_operand.hbm [shape: f32[32,192], index: 3, kind: output, shape index: {}]
  %s4 = sld [smem:[#allocation0]]
  $region34: #{tpu_custom_call.1} parent=0
    _
  %s6 = ssub.s32 1, %s4
  %s7 = scalar_select 0, %s6, %s4
  $region1: #{tpu_custom_call.1} parent=0
    #allocation2 [shape = 'u8[16384]{0}', space=vmem, size = 0x4000, scoped, tag = 'input window, operand 0, single buffered']
    #allocation3 [shape = 's32[1]{0}', space=sflag, size = 0x4, scoped, tag = 'scoped memory for tpu_custom_call.1']
    #allocation4 [shape = 's32[1]{0}', space=sflag, size = 0x4, scoped, tag = 'scoped memory for tpu_custom_call.1']
    #allocation5 [shape = 'u8[65536]{0}', space=vmem, size = 0x10000, scoped, tag = 'input window, operand 1, single buffered']
    #allocation6 [shape = 's32[1]{0}', space=sflag, size = 0x4, scoped, tag = 'scoped memory for tpu_custom_call.1']
    #allocation7 [shape = 'u8[1024]{0}', space=vmem, size = 0x400, scoped, tag = 'input window, operand 2, single buffered']
    #allocation8 [shape = 'u8[32768]{0}', space=vmem, size = 0x8000, scoped, tag = 'output window, operand 0, single buffered']
    %8 = vsyncpa [#allocation3], 0
    %9 = vsyncpa [#allocation6], 0
    %10 = vsyncpa [#allocation4], 0
    // Predicated region
    $region2: #{tpu_custom_call.1} parent=1 // pred_check
      _
    $region3: #{tpu_custom_call.1} parent=1 // pred_check_branch
      %12 = sbr.rel (0) target = $region5
    $region4: #{tpu_custom_call.1} parent=1 // pred_region
      %s14 = ssub.s32 512, 512
      %15 = vsyncadd [#allocation3], %s14
      %s16 = sshll.u32 [#allocation2], 4
      %s17 = int_to_ptr.vmem [resolvable:$true] %s16
      %22 = dma.hbm_to_vmem [thread:$0]  %s0, 512, %s17, [#allocation3], 128, 128, 8
    $region5: #{tpu_custom_call.1} parent=1 // pred_fallthru
      _
    // Predicated region
    $region6: #{tpu_custom_call.1} parent=1 // pred_check
      _
    $region7: #{tpu_custom_call.1} parent=1 // pred_check_branch
      %24 = sbr.rel (0) target = $region9
    $region8: #{tpu_custom_call.1} parent=1 // pred_region
      %s26 = ssub.s32 2048, 2048
      %27 = vsyncadd [#allocation6], %s26
      %s28 = sshll.u32 [#allocation5], 4
      %s29 = int_to_ptr.vmem [resolvable:$true] %s28
      %34 = dma.hbm_to_vmem [thread:$0]  %s1, 2048, %s29, [#allocation6], 256, 256, 16
    $region9: #{tpu_custom_call.1} parent=1 // pred_fallthru
      _
    // Predicated region
    $region10: #{tpu_custom_call.1} parent=1 // pred_check
      _
    $region11: #{tpu_custom_call.1} parent=1 // pred_check_branch
      %36 = sbr.rel (0) target = $region13
    $region12: #{tpu_custom_call.1} parent=1 // pred_region
      %s38 = ssub.s32 32, 32
      %39 = vsyncadd [#allocation6], %s38
      %s41 = sshll.u32 [#allocation7], 4
      %s42 = int_to_ptr.vmem [resolvable:$true] %s41
      %44 = dma.hbm_to_vmem [thread:$0]  %s2, 32, %s42, [#allocation6]
    $region13: #{tpu_custom_call.1} parent=1 // pred_fallthru
      _
    // Predicated region
    $region14: #{tpu_custom_call.1} parent=1 // pred_check
      _
    $region15: #{tpu_custom_call.1} parent=1 // pred_check_branch
      %46 = sbr.rel (0) target = $region17
    $region16: #{tpu_custom_call.1} parent=1 // pred_region
      %47 = dma.done [#allocation3], 512
    $region17: #{tpu_custom_call.1} parent=1 // pred_fallthru
      _
    // Predicated region
    $region18: #{tpu_custom_call.1} parent=1 // pred_check
      _
    $region19: #{tpu_custom_call.1} parent=1 // pred_check_branch
      %49 = sbr.rel (0) target = $region21
    $region20: #{tpu_custom_call.1} parent=1 // pred_region
      %50 = dma.done [#allocation6], 2048
    $region21: #{tpu_custom_call.1} parent=1 // pred_fallthru
      _
    // Predicated region
    $region22: #{tpu_custom_call.1} parent=1 // pred_check
      _
    $region23: #{tpu_custom_call.1} parent=1 // pred_check_branch
      %52 = sbr.rel (0) target = $region25
    $region24: #{tpu_custom_call.1} parent=1 // pred_region
      %53 = dma.done [#allocation6], 32
    $region25: #{tpu_custom_call.1} parent=1 // pred_fallthru
      _
    %v54 = vld [vmem:[#allocation2] sm:$0xff]
    %v55 = vld [vmem:[#allocation2 + $0x8] sm:$0xff]
    %v56 = vld [vmem:[#allocation2 + $0x10] sm:$0xff]
    %v57 = vld [vmem:[#allocation2 + $0x18] sm:$0xff]
    %v58 = vld [vmem:[#allocation5] sm:$0xff]
    %v59 = vld [vmem:[#allocation5 + $0x8] sm:$0xff]
    %v60 = vld [vmem:[#allocation5 + $0x10] sm:$0xff]
    %v61 = vld [vmem:[#allocation5 + $0x18] sm:$0xff]
    %v62 = vld [vmem:[#allocation5 + $0x20] sm:$0xff]
    %v63 = vld [vmem:[#allocation5 + $0x28] sm:$0xff]
    %v64 = vld [vmem:[#allocation5 + $0x30] sm:$0xff]
    %v65 = vld [vmem:[#allocation5 + $0x38] sm:$0xff]
    %v66 = vld [vmem:[#allocation5 + $0x40] sm:$0xff]
    %v67 = vld [vmem:[#allocation5 + $0x48] sm:$0xff]
    %v68 = vld [vmem:[#allocation5 + $0x50] sm:$0xff]
    %v69 = vld [vmem:[#allocation5 + $0x58] sm:$0xff]
    %v70 = vld [vmem:[#allocation5 + $0x60] sm:$0xff]
    %v71 = vld [vmem:[#allocation5 + $0x68] sm:$0xff]
    %v72 = vld [vmem:[#allocation5 + $0x70] sm:$0xff]
    %v73 = vld [vmem:[#allocation5 + $0x78] sm:$0xff]
    %v74 = vld [vmem:[#allocation7] sm:$0x3]
    %v76 = vlaneseq
    %v77 = vshrl.u32 %v76, 7
    %v78 = vsub.s32 0, %v77
    %v79 = vrot.slane %v74, %v78
    %v80 = vlaneseq
    %v81 = vshrl.u32 %v80, 7
    %v82 = vsub.s32 1, %v81
    %v83 = vrot.slane %v74, %v82
    %vm86 = vcmask 523264
    %v88 = vsel %vm86, %v54, 0
    %v91 = vsel %vm86, %v55, 0
    %v94 = vsel %vm86, %v56, 0
    %v97 = vsel %vm86, %v57, 0
    %99 = vmatprep.subr.mxu0 %v59
    %100 = vmatpush1.msra.mxu0 %v58
    %101 = vmatprep.subr.mxu0 %v61
    %102 = vmatpush1.msra.mxu0 %v60
    %103 = vmatprep.subr.mxu0 %v63
    %104 = vmatpush1.msra.mxu0 %v62
    %105 = vmatprep.subr.mxu0 %v65
    %106 = vmatpush1.msra.mxu0 %v64
    %107 = vmatprep.subr.mxu0 %v67
    %108 = vmatpush1.msra.mxu0 %v66
    %109 = vmatprep.subr.mxu0 %v69
    %110 = vmatpush1.msra.mxu0 %v68
    %111 = vmatprep.subr.mxu0 %v71
    %112 = vmatpush1.msra.mxu0 %v70
    %113 = vmatprep.subr.mxu0 %v73
    %114 = vmatpush1.msra.mxu0 %v72
    %115 = vmatprep.subr.mxu0 0.0
    %116 = vmatpush1.msra.mxu0 0.0
    %117 = vmatprep.subr.mxu0 0.0
    %118 = vmatpush1.msra.mxu0 0.0
    %119 = vmatprep.subr.mxu0 0.0
    %120 = vmatpush1.msra.mxu0 0.0
    %121 = vmatprep.subr.mxu0 0.0
    %122 = vmatpush1.msra.mxu0 0.0
    %123 = vmatprep.subr.mxu0 0.0
    %124 = vmatpush1.msra.mxu0 0.0
    %125 = vmatprep.subr.mxu0 0.0
    %126 = vmatpush1.msra.mxu0 0.0
    %127 = vmatprep.subr.mxu0 0.0
    %128 = vmatpush1.msra.mxu0 0.0
    %129 = vmatprep.subr.mxu0 0.0
    %130 = vmatpush1.msra.mxu0 0.0
    %131 = vmatprep.subr.mxu0 0.0
    %132 = vmatpush1.msra.mxu0 0.0
    %133 = vmatprep.subr.mxu0 0.0
    %134 = vmatpush1.msra.mxu0 0.0
    %135 = vmatprep.subr.mxu0 0.0
    %136 = vmatpush1.msra.mxu0 0.0
    %137 = vmatprep.subr.mxu0 0.0
    %138 = vmatpush1.msra.mxu0 0.0
    %139 = vmatprep.subr.mxu0 0.0
    %140 = vmatpush1.msra.mxu0 0.0
    %141 = vmatprep.subr.mxu0 0.0
    %142 = vmatpush1.msra.mxu0 0.0
    %143 = vmatprep.subr.mxu0 0.0
    %144 = vmatpush1.msra.mxu0 0.0
    %145 = vmatprep.subr.mxu0 0.0
    %146 = vmatpush1.msra.mxu0 0.0
    %147 = vmatprep.subr.mxu0 0.0
    %148 = vmatpush1.msra.mxu0 0.0
    %149 = vmatprep.subr.mxu0 0.0
    %150 = vmatpush1.msra.mxu0 0.0
    %151 = vmatprep.subr.mxu0 0.0
    %152 = vmatpush1.msra.mxu0 0.0
    %153 = vmatprep.subr.mxu0 0.0
    %154 = vmatpush1.msra.mxu0 0.0
    %155 = vmatprep.subr.mxu0 0.0
    %156 = vmatpush1.msra.mxu0 0.0
    %157 = vmatprep.subr.mxu0 0.0
    %158 = vmatpush1.msra.mxu0 0.0
    %159 = vmatprep.subr.mxu0 0.0
    %160 = vmatpush1.msra.mxu0 0.0
    %161 = vmatprep.subr.mxu0 0.0
    %162 = vmatpush1.msra.mxu0 0.0
    %163 = vmatprep.mubr.f32.mxu0 0.0
    %164 = vmatmul.mubr.f32.gmra.mrb[0].mxu0 %v88
    %v165 = vpop.f32.mrb[0].mxu0
    %v166 = vadd.f32 %v79, %v165
    %v167 = vpop.f32.mrb[0].mxu0
    %v168 = vadd.f32 %v83, %v167
    %169 = vmatprep.mubr.f32.mxu0 0.0
    %170 = vmatmul.mubr.f32.gmra.mrb[0].mxu0 %v91
    %v171 = vpop.f32.mrb[0].mxu0
    %v172 = vadd.f32 %v79, %v171
    %v173 = vpop.f32.mrb[0].mxu0
    %v174 = vadd.f32 %v83, %v173
    %175 = vmatprep.mubr.f32.mxu0 0.0
    %176 = vmatmul.mubr.f32.gmra.mrb[0].mxu0 %v94
    %v177 = vpop.f32.mrb[0].mxu0
    %v178 = vadd.f32 %v79, %v177
    %v179 = vpop.f32.mrb[0].mxu0
    %v180 = vadd.f32 %v83, %v179
    %181 = vmatprep.mubr.f32.mxu0 0.0
    %182 = vmatmul.mubr.f32.gmra.mrb[0].mxu0 %v97
    %v183 = vpop.f32.mrb[0].mxu0
    %v184 = vadd.f32 %v79, %v183
    %v185 = vpop.f32.mrb[0].mxu0
    %v186 = vadd.f32 %v83, %v185
    %187 = vdwg.mxu0
    %188 = vst [vmem:[#allocation8] sm:$0xff] %v166
    %189 = vst.msk [vmem:[#allocation8 + $0x8] sm:$0xff] %vm86, %v168
    %190 = vst [vmem:[#allocation8 + $0x10] sm:$0xff] %v172
    %191 = vst.msk [vmem:[#allocation8 + $0x18] sm:$0xff] %vm86, %v174
    %192 = vst [vmem:[#allocation8 + $0x20] sm:$0xff] %v178
    %193 = vst.msk [vmem:[#allocation8 + $0x28] sm:$0xff] %vm86, %v180
    %194 = vst [vmem:[#allocation8 + $0x30] sm:$0xff] %v184
    %195 = vst.msk [vmem:[#allocation8 + $0x38] sm:$0xff] %vm86, %v186
    // Predicated region
    $region26: #{tpu_custom_call.1} parent=1 // pred_check
      _
    $region27: #{tpu_custom_call.1} parent=1 // pred_check_branch
      %197 = sbr.rel (0) target = $region29
    $region28: #{tpu_custom_call.1} parent=1 // pred_region
      %s199 = ssub.s32 1024, 1024
      %200 = vsyncadd [#allocation4], %s199
      %s201 = sshll.u32 [#allocation8], 4
      %s202 = int_to_ptr.vmem [resolvable:$true] %s201
      %207 = dma.vmem_to_hbm [thread:$0]  %s202, 1024, %s3, [#allocation4], 256, 256, 16
    $region29: #{tpu_custom_call.1} parent=1 // pred_fallthru
      _
    // Predicated region
    $region30: #{tpu_custom_call.1} parent=1 // pred_check
      _
    $region31: #{tpu_custom_call.1} parent=1 // pred_check_branch
      %209 = sbr.rel (0) target = $region33
    $region32: #{tpu_custom_call.1} parent=1 // pred_region
      %210 = dma.done [#allocation4], 1024
    $region33: #{tpu_custom_call.1} parent=1 // pred_fallthru
      _
    %211 = vsyncpa [#allocation3], 1
    %212 = vsyncpa [#allocation6], 1
    %213 = vsyncpa [#allocation4], 1

</llo_original>
